<compile_context>
chip_gen: v7x
topology: tpu7x:2x2x1
jax: 0.10.0
libtpu: 0.0.40
codegen_flags: <defaults>
</compile_context>

<pallas_src>
import functools

import jax
import jax.numpy as jnp
from jax.experimental import pallas as pl
from jax.experimental.pallas import tpu as pltpu


def mixer_kernel(x_ref, w1_ref, b1_ref, w2_ref, b2_ref, o_ref, *, inv_s):
    # x: (S_pad, tf) stocks x feature-tile, native layout (no transposes anywhere).
    x = x_ref[...].astype(jnp.float32)

    # One-pass LayerNorm statistics over the stocks axis (axis 0 -> sublane reduction).
    # Padded stock rows are zero, so sums are unaffected; divide by the REAL count.
    s1 = jnp.sum(x, axis=0, keepdims=True) * inv_s            # mean      (1, tf)
    s2 = jnp.sum(x * x, axis=0, keepdims=True) * inv_s        # E[x^2]    (1, tf)
    var = s2 - s1 * s1
    xn = (x - s1) * jax.lax.rsqrt(var + 1e-5)                 # (S_pad, tf)

    # dense1 with LN gamma/beta folded in: (H, S_pad)@(S_pad, tf) + (H, 1)
    h = jnp.dot(w1_ref[...], xn, preferred_element_type=jnp.float32) + b1_ref[...]
    # Hardswish with the 1/6 folded into dense2's weight: x * relu6(x + 3)
    h = h * jnp.clip(h + 3.0, 0.0, 6.0)
    # dense2 (weight pre-scaled by 1/6): (S_pad, H)@(H, tf) + (S_pad, 1)
    y = jnp.dot(w2_ref[...], h, preferred_element_type=jnp.float32) + b2_ref[...]

    o_ref[...] = y.astype(o_ref.dtype)                        # lane-dense store


@functools.partial(jax.jit, static_argnames=("max_tf",))
def no_graph_mixer(x, gamma, beta, w1, b1, w2, b2, max_tf=2048):
    """x: (S, F); gamma/beta: (S,); w1: (H, S); b1: (H,); w2: (S, H); b2: (S,)."""
    S, F = x.shape
    H = w1.shape[0]
    f32 = jnp.float32

    # ---- static tiling decisions (shapes are static under jit) ----------------
    S_pad = ((S + 7) // 8) * 8          # sublane-align the stocks axis
    F_pad = ((F + 127) // 128) * 128    # lane-align the feature axis (no masked stores)

    # VMEM-aware cap on the tile width: ~5 live (S_pad, tf) f32 buffers (3 in + 2 out).
    vmem_budget = 8 * 1024 * 1024
    cap = max(128, min(int(max_tf), (vmem_budget // (5 * S_pad * 4)) // 128 * 128))
    # Largest multiple of 128 <= cap that divides F_pad and keeps >= 2 grid blocks
    # (so v7x's second TensorCore gets work).  F_pad == 128 degenerates to one block.
    tf = 128
    t = 256
    while t <= min(cap, F_pad):
        if F_pad % t == 0 and (F_pad // t) >= 2:
            tf = t
        t += 128
    num_blocks = F_pad // tf
    buf_depth = 3 if num_blocks >= 3 else 2

    tile_bytes = S_pad * tf * 4
    param_bytes = (H * S_pad + H + S_pad * H + S_pad) * 4
    vmem_needed = (buf_depth + 2) * tile_bytes + 2 * param_bytes
    vmem_limit = int(min(max(4 * vmem_needed, 32 * 1024 * 1024), 48 * 1024 * 1024))

    # ---- parameter folding (exact algebra) ------------------------------------
    # LayerNorm affine into dense1:  W1 @ (g*xn + b) + b1 = (W1*g) @ xn + (W1@b + b1)
    w1_eff = w1.astype(f32) * gamma.astype(f32)[None, :]                      # (H, S)
    b1_eff = (b1.astype(f32) + w1.astype(f32) @ beta.astype(f32))[:, None]    # (H, 1)
    # Hardswish 1/6 into dense2:    W2 @ (g/6) + b2 = (W2/6) @ g + b2
    w2_eff = w2.astype(f32) * (1.0 / 6.0)                                     # (S, H)
    b2_col = b2.astype(f32)[:, None]                                          # (S, 1)

    x_f = x.astype(f32)
    if S_pad != S or F_pad != F:
        x_f = jnp.pad(x_f, ((0, S_pad - S), (0, F_pad - F)))
    if S_pad != S:
        w1_eff = jnp.pad(w1_eff, ((0, 0), (0, S_pad - S)))      # zero cols: padded rows ignored
        w2_eff = jnp.pad(w2_eff, ((0, S_pad - S), (0, 0)))      # zero rows: padded outputs = 0
        b2_col = jnp.pad(b2_col, ((0, S_pad - S), (0, 0)))

    const = lambda i: (0, 0)  # params stay VMEM-resident across the grid
    out = pl.pallas_call(
        functools.partial(mixer_kernel, inv_s=1.0 / S),
        out_shape=jax.ShapeDtypeStruct((S_pad, F_pad), x.dtype),
        grid_spec=pltpu.PrefetchScalarGridSpec(
            num_scalar_prefetch=0,
            grid=(num_blocks,),
            in_specs=[
                pl.BlockSpec((S_pad, tf), lambda i: (0, i),
                             pipeline_mode=pl.Buffered(buf_depth)),  # x feature-tile
                pl.BlockSpec((H, S_pad), const),                     # folded dense1 weight
                pl.BlockSpec((H, 1), const),                         # folded dense1 bias
                pl.BlockSpec((S_pad, H), const),                     # dense2 weight / 6
                pl.BlockSpec((S_pad, 1), const),                     # dense2 bias
            ],
            out_specs=pl.BlockSpec((S_pad, tf), lambda i: (0, i)),
        ),
        compiler_params=pltpu.CompilerParams(
            dimension_semantics=("parallel",),
            vmem_limit_bytes=vmem_limit,
        ),
    )(x_f, w1_eff, b1_eff, w2_eff, b2_col)

    if S_pad != S or F_pad != F:
        out = out[:S, :F]
    return out


def no_graph_mixer_ref(x, gamma, beta, w1, b1, w2, b2):
    # Pure-JAX reference replicating the PyTorch forward literally.
    xt = x.astype(jnp.float32).T                              # (F, S)
    mean = jnp.mean(xt, axis=-1, keepdims=True)
    var = jnp.mean((xt - mean) ** 2, axis=-1, keepdims=True)
    xn = (xt - mean) * jax.lax.rsqrt(var + 1e-5)
    xn = xn * gamma + beta
    h = xn @ w1.T + b1
    h = h * jnp.clip(h + 3.0, 0.0, 6.0) / 6.0
    y = h @ w2.T + b2
    return y.T.astype(x.dtype)                                # (S, F)


if __name__ == "__main__":
    # stocks=16, hidden_dim=20 (PyTorch default), features/seq=1024 so the feature
    # axis tiles into two wide, lane-dense 512-wide blocks (>=2 blocks for v7x megacore).
    S, H, F = 16, 20, 1024

    key = jax.random.PRNGKey(0)
    kx, kg, kb, kw1, kb1, kw2, kb2 = jax.random.split(key, 7)

    x = jax.random.normal(kx, (S, F), dtype=jnp.float32)

    # Parameter shapes match nn.LayerNorm / nn.Linear exactly.
    gamma = 1.0 + 0.1 * jax.random.normal(kg, (S,), dtype=jnp.float32)   # LN weight
    beta = 0.1 * jax.random.normal(kb, (S,), dtype=jnp.float32)          # LN bias
    w1 = jax.random.normal(kw1, (H, S), dtype=jnp.float32) / jnp.sqrt(S) # dense1.weight
    b1 = 0.1 * jax.random.normal(kb1, (H,), dtype=jnp.float32)           # dense1.bias
    w2 = jax.random.normal(kw2, (S, H), dtype=jnp.float32) / jnp.sqrt(H) # dense2.weight
    b2 = 0.1 * jax.random.normal(kb2, (S,), dtype=jnp.float32)           # dense2.bias

    out = jax.block_until_ready(no_graph_mixer(x, gamma, beta, w1, b1, w2, b2))
    ref = no_graph_mixer_ref(x, gamma, beta, w1, b1, w2, b2)

    assert out.shape == (S, F), out.shape
    max_err = float(jnp.max(jnp.abs(out - ref)))
    assert jnp.allclose(out, ref, atol=1e-4, rtol=1e-4), max_err

    print("KERNEL_OK")
</pallas_src>

<mosaic_0001>
module attributes {stable_mosaic.version = 11 : i64} {
  func.func @mixer_kernel(%arg0: i32, %arg1: memref<16x512xf32, #tpu.memory_space<vmem>>, %arg2: memref<20x16xf32, #tpu.memory_space<vmem>>, %arg3: memref<20x1xf32, #tpu.memory_space<vmem>>, %arg4: memref<16x20xf32, #tpu.memory_space<vmem>>, %arg5: memref<16x1xf32, #tpu.memory_space<vmem>>, %arg6: memref<16x512xf32, #tpu.memory_space<vmem>>) attributes {dimension_semantics = [#tpu.dimension_semantics<parallel>], iteration_bounds = array<i64: 2>, scalar_prefetch = 0 : i64, scratch_operands = 0 : i64, tpu.core_type = #tpu.core_type<tc>, window_params = [{pipeline_mode = #tpu.pipeline_mode<double_buffered>, transform_indices = @transform_0, window_bounds = array<i64: 16, 512>}, {pipeline_mode = #tpu.pipeline_mode<synchronous>, transform_indices = @transform_1, window_bounds = array<i64: 20, 16>}, {pipeline_mode = #tpu.pipeline_mode<synchronous>, transform_indices = @transform_2, window_bounds = array<i64: 20, 1>}, {pipeline_mode = #tpu.pipeline_mode<synchronous>, transform_indices = @transform_3, window_bounds = array<i64: 16, 20>}, {pipeline_mode = #tpu.pipeline_mode<synchronous>, transform_indices = @transform_4, window_bounds = array<i64: 16, 1>}, {transform_indices = @transform_5, window_bounds = array<i64: 16, 512>}]} {
    %c0 = arith.constant 0 : index
    %c0_0 = arith.constant 0 : index
    %0 = vector.load %arg1[%c0, %c0_0] : memref<16x512xf32, #tpu.memory_space<vmem>>, vector<16x512xf32>
    %cst = arith.constant dense<0.000000e+00> : vector<512xf32>
    %1 = vector.multi_reduction <add>, %0, %cst [0] : vector<16x512xf32> to vector<512xf32>
    %2 = vector.shape_cast %1 : vector<512xf32> to vector<1x512xf32>
    %cst_1 = arith.constant 6.250000e-02 : f32
    %3 = vector.broadcast %cst_1 : f32 to vector<1x512xf32>
    %4 = arith.mulf %2, %3 : vector<1x512xf32>
    %5 = arith.mulf %0, %0 : vector<16x512xf32>
    %cst_2 = arith.constant dense<0.000000e+00> : vector<512xf32>
    %6 = vector.multi_reduction <add>, %5, %cst_2 [0] : vector<16x512xf32> to vector<512xf32>
    %7 = vector.shape_cast %6 : vector<512xf32> to vector<1x512xf32>
    %cst_3 = arith.constant 6.250000e-02 : f32
    %8 = vector.broadcast %cst_3 : f32 to vector<1x512xf32>
    %9 = arith.mulf %7, %8 : vector<1x512xf32>
    %10 = arith.mulf %4, %4 : vector<1x512xf32>
    %11 = arith.subf %9, %10 : vector<1x512xf32>
    %12 = vector.broadcast %4 : vector<1x512xf32> to vector<16x512xf32>
    %13 = arith.subf %0, %12 : vector<16x512xf32>
    %cst_4 = arith.constant 9.99999974E-6 : f32
    %14 = vector.broadcast %cst_4 : f32 to vector<1x512xf32>
    %15 = arith.addf %11, %14 : vector<1x512xf32>
    %16 = math.rsqrt %15 : vector<1x512xf32>
    %17 = vector.broadcast %16 : vector<1x512xf32> to vector<16x512xf32>
    %18 = arith.mulf %13, %17 : vector<16x512xf32>
    %c0_5 = arith.constant 0 : index
    %c0_6 = arith.constant 0 : index
    %19 = vector.load %arg2[%c0_5, %c0_6] : memref<20x16xf32, #tpu.memory_space<vmem>>, vector<20x16xf32>
    %cst_7 = arith.constant dense<0.000000e+00> : vector<20x512xf32>
    %20 = tpu.matmul %19, %18, %cst_7 {dimension_numbers = #tpu.dot_dimension_numbers<[1], [0], [0], [1], [0, 0, 1, 1], [], []>} : vector<20x16xf32>, vector<16x512xf32>, vector<20x512xf32> -> vector<20x512xf32>
    %c0_8 = arith.constant 0 : index
    %c0_9 = arith.constant 0 : index
    %21 = vector.load %arg3[%c0_8, %c0_9] : memref<20x1xf32, #tpu.memory_space<vmem>>, vector<20x1xf32>
    %22 = vector.broadcast %21 : vector<20x1xf32> to vector<20x512xf32>
    %23 = arith.addf %20, %22 : vector<20x512xf32>
    %cst_10 = arith.constant 3.000000e+00 : f32
    %24 = vector.broadcast %cst_10 : f32 to vector<20x512xf32>
    %25 = arith.addf %23, %24 : vector<20x512xf32>
    %cst_11 = arith.constant 0.000000e+00 : f32
    %cst_12 = arith.constant 6.000000e+00 : f32
    %26 = vector.broadcast %cst_11 : f32 to vector<20x512xf32>
    %27 = arith.maximumf %26, %25 : vector<20x512xf32>
    %28 = vector.broadcast %cst_12 : f32 to vector<20x512xf32>
    %29 = arith.minimumf %28, %27 : vector<20x512xf32>
    %30 = arith.mulf %23, %29 : vector<20x512xf32>
    %c0_13 = arith.constant 0 : index
    %c0_14 = arith.constant 0 : index
    %31 = vector.load %arg4[%c0_13, %c0_14] : memref<16x20xf32, #tpu.memory_space<vmem>>, vector<16x20xf32>
    %cst_15 = arith.constant dense<0.000000e+00> : vector<16x512xf32>
    %32 = tpu.matmul %31, %30, %cst_15 {dimension_numbers = #tpu.dot_dimension_numbers<[1], [0], [0], [1], [0, 0, 1, 1], [], []>} : vector<16x20xf32>, vector<20x512xf32>, vector<16x512xf32> -> vector<16x512xf32>
    %c0_16 = arith.constant 0 : index
    %c0_17 = arith.constant 0 : index
    %33 = vector.load %arg5[%c0_16, %c0_17] : memref<16x1xf32, #tpu.memory_space<vmem>>, vector<16x1xf32>
    %34 = vector.broadcast %33 : vector<16x1xf32> to vector<16x512xf32>
    %35 = arith.addf %32, %34 : vector<16x512xf32>
    %c0_18 = arith.constant 0 : index
    %c0_19 = arith.constant 0 : index
    %36 = vector.load %arg6[%c0_18, %c0_19] : memref<16x512xf32, #tpu.memory_space<vmem>>, vector<16x512xf32>
    tpu.vector_store %arg6[%c0_18, %c0_19], %35 {strides = array<i32>} : memref<16x512xf32, #tpu.memory_space<vmem>>, vector<16x512xf32>,
    return
  }
  func.func @transform_0(%arg0: i32) -> (i32, i32) {
    %c0_i32 = arith.constant 0 : i32
    %c0_i32_0 = arith.constant 0 : i32
    return %c0_i32, %arg0 : i32, i32
  }
  func.func @transform_1(%arg0: i32) -> (i32, i32) {
    %c0_i32 = arith.constant 0 : i32
    %c0_i32_0 = arith.constant 0 : i32
    %c0_i32_1 = arith.constant 0 : i32
    return %c0_i32, %c0_i32_0 : i32, i32
  }
  func.func @transform_2(%arg0: i32) -> (i32, i32) {
    %c0_i32 = arith.constant 0 : i32
    %c0_i32_0 = arith.constant 0 : i32
    %c0_i32_1 = arith.constant 0 : i32
    return %c0_i32, %c0_i32_0 : i32, i32
  }
  func.func @transform_3(%arg0: i32) -> (i32, i32) {
    %c0_i32 = arith.constant 0 : i32
    %c0_i32_0 = arith.constant 0 : i32
    %c0_i32_1 = arith.constant 0 : i32
    return %c0_i32, %c0_i32_0 : i32, i32
  }
  func.func @transform_4(%arg0: i32) -> (i32, i32) {
    %c0_i32 = arith.constant 0 : i32
    %c0_i32_0 = arith.constant 0 : i32
    %c0_i32_1 = arith.constant 0 : i32
    return %c0_i32, %c0_i32_0 : i32, i32
  }
  func.func @transform_5(%arg0: i32) -> (i32, i32) {
    %c0_i32 = arith.constant 0 : i32
    %c0_i32_0 = arith.constant 0 : i32
    return %c0_i32, %arg0 : i32, i32
  }
}

</mosaic_0001>

<llo_original>
// kernel: no_graph_mixer.1
$region0: #{no_graph_mixer.1}
  #allocation0 [shape = 'u32[]', space=smem, size = 0x4, offset = 0x4, fixed_abs, tag = 'smem constant byte address 0x4 - core index']
  #allocation1 [shape = 'u32[144,128]{1,0:T(1,128)}', space=vmem, size = 0x12000, scoped, tag = 'internal scratch']
  %s0 = inlined_call_operand.vmem [shape: f32[16,1024], index: 0, kind: input, shape index: {}]
  %s1 = inlined_call_operand.vmem [shape: f32[20,16], index: 1, kind: input, shape index: {}]
  %s2 = inlined_call_operand.vmem [shape: f32[20,1], index: 2, kind: input, shape index: {}]
  %s3 = inlined_call_operand.vmem [shape: f32[16,20], index: 3, kind: input, shape index: {}]
  %s4 = inlined_call_operand.vmem [shape: f32[16,1], index: 4, kind: input, shape index: {}]
  %s5 = inlined_call_operand.hbm [shape: f32[16,1024], index: 5, kind: output, shape index: {}]
  %s6 = sld [smem:[#allocation0]]
  $region76: #{no_graph_mixer.1} parent=0
    _
  %s8 = ssub.s32 1, %s6
  %s9 = scalar_select 0, %s8, %s6
  $region1: #{no_graph_mixer.1} parent=0
    #allocation2 [shape = 'u8[65536]{0}', space=vmem, size = 0x10000, scoped, tag = 'input window, operand 0']
    #allocation3 [shape = 'u8[65536]{0}', space=vmem, size = 0x10000, scoped, tag = 'output window, operand 0']
    #allocation4 [shape = 's32[2]{0}', space=sflag, size = 0x8, scoped, tag = 'scoped memory for no_graph_mixer.1']
    %10 = vsyncpa [#allocation4], 0
    %s11 = scalar_lea.sflag [#allocation4], 1
    %12 = vsyncpa %s11, 0
    loop: start=0, step=1, limit=4
    $region2: #{no_graph_mixer.1} parent=1 // loop_pre_header
      _
    $region3: #{no_graph_mixer.1} parent=1 // loop_header
      %s14 = sphi 0, %s18
      %p15 = scmp.ge.s32.totalorder %s14, 4
      %s24 = sphi 0, %s26
      %s27 = sphi 0, %s24
      %s28 = sphi 0, %s27
      %s44 = sphi 0, %s28
      %s48 = sphi 0, %s48
      %s50 = sphi 0, %s48
      %s51 = sphi 0, %s50
      %s65 = sphi 0, %s51
      %s69 = sphi 0, %s69
      %s71 = sphi 0, %s69
      %s72 = sphi 0, %s71
      %s86 = sphi 0, %s72
      %s90 = sphi 0, %s90
      %s92 = sphi 0, %s90
      %s93 = sphi 0, %s92
      %s107 = sphi 0, %s93
      %s111 = sphi 0, %s111
      %s113 = sphi 0, %s111
      %s114 = sphi 0, %s113
      %s128 = sphi 0, %s114
      %s134 = sphi 0, %s136
      %s137 = sphi 0, %s134
      %s138 = sphi 0, %s137
      %s154 = sphi 0, %s138
    $region4: #{no_graph_mixer.1} parent=1 // loop_header_branch
      %17 = sbr.rel (%p15) target = $region8
    $region5: #{no_graph_mixer.1} parent=1 // loop_body
      %s19 = ssub.s32 %s14, 1
      %s20 = ssub.s32 %s14, 2
      %s21 = sadd.s32 %s14, 1
      %s22 = ssub.s32 %s14, %s21
      %p23 = scmp.eq.s32.totalorder %s22, 0
      %s25 = sadd.s32 %s24, 1
      %s26 = scalar_select %p23, %s24, %s25
      %p29 = pneg %p23
      %p30 = scmp.eq.s32.totalorder %s14, 1
      %p31 = por %p29, %p30
      %p32 = scmp.ne.s32.totalorder %s24, %s27
      %p33 = scmp.eq.s32.totalorder %s14, 0
      %p34 = por %p32, %p33
      %p35 = scmp.ne.s32.totalorder %s24, %s27
      %p36 = scmp.eq.s32.totalorder %s19, 1
      %p37 = por %p35, %p36
      %p38 = scmp.ne.s32.totalorder %s27, %s28
      %p39 = scmp.eq.s32.totalorder %s19, 0
      %p40 = por %p38, %p39
      %p41 = scmp.ne.s32.totalorder %s27, %s28
      %p42 = scmp.eq.s32.totalorder %s20, 1
      %p43 = por %p41, %p42
      %p45 = scmp.ne.s32.totalorder %s28, %s44
      %p46 = scmp.eq.s32.totalorder %s20, 0
      %p47 = por %p45, %p46
      %s49 = sadd.s32 %s48, 1
      %p52 = scmp.eq.s32.totalorder %s14, 1
      %p53 = scmp.ne.s32.totalorder %s48, %s50
      %p54 = scmp.eq.s32.totalorder %s14, 0
      %p55 = por %p53, %p54
      %p56 = scmp.ne.s32.totalorder %s48, %s50
      %p57 = scmp.eq.s32.totalorder %s19, 1
      %p58 = por %p56, %p57
      %p59 = scmp.ne.s32.totalorder %s50, %s51
      %p60 = scmp.eq.s32.totalorder %s19, 0
      %p61 = por %p59, %p60
      %p62 = scmp.ne.s32.totalorder %s50, %s51
      %p63 = scmp.eq.s32.totalorder %s20, 1
      %p64 = por %p62, %p63
      %p66 = scmp.ne.s32.totalorder %s51, %s65
      %p67 = scmp.eq.s32.totalorder %s20, 0
      %p68 = por %p66, %p67
      %s70 = sadd.s32 %s69, 1
      %p73 = scmp.eq.s32.totalorder %s14, 1
      %p74 = scmp.ne.s32.totalorder %s69, %s71
      %p75 = scmp.eq.s32.totalorder %s14, 0
      %p76 = por %p74, %p75
      %p77 = scmp.ne.s32.totalorder %s69, %s71
      %p78 = scmp.eq.s32.totalorder %s19, 1
      %p79 = por %p77, %p78
      %p80 = scmp.ne.s32.totalorder %s71, %s72
      %p81 = scmp.eq.s32.totalorder %s19, 0
      %p82 = por %p80, %p81
      %p83 = scmp.ne.s32.totalorder %s71, %s72
      %p84 = scmp.eq.s32.totalorder %s20, 1
      %p85 = por %p83, %p84
      %p87 = scmp.ne.s32.totalorder %s72, %s86
      %p88 = scmp.eq.s32.totalorder %s20, 0
      %p89 = por %p87, %p88
      %s91 = sadd.s32 %s90, 1
      %p94 = scmp.eq.s32.totalorder %s14, 1
      %p95 = scmp.ne.s32.totalorder %s90, %s92
      %p96 = scmp.eq.s32.totalorder %s14, 0
      %p97 = por %p95, %p96
      %p98 = scmp.ne.s32.totalorder %s90, %s92
      %p99 = scmp.eq.s32.totalorder %s19, 1
      %p100 = por %p98, %p99
      %p101 = scmp.ne.s32.totalorder %s92, %s93
      %p102 = scmp.eq.s32.totalorder %s19, 0
      %p103 = por %p101, %p102
      %p104 = scmp.ne.s32.totalorder %s92, %s93
      %p105 = scmp.eq.s32.totalorder %s20, 1
      %p106 = por %p104, %p105
      %p108 = scmp.ne.s32.totalorder %s93, %s107
      %p109 = scmp.eq.s32.totalorder %s20, 0
      %p110 = por %p108, %p109
      %s112 = sadd.s32 %s111, 1
      %p115 = scmp.eq.s32.totalorder %s14, 1
      %p116 = scmp.ne.s32.totalorder %s111, %s113
      %p117 = scmp.eq.s32.totalorder %s14, 0
      %p118 = por %p116, %p117
      %p119 = scmp.ne.s32.totalorder %s111, %s113
      %p120 = scmp.eq.s32.totalorder %s19, 1
      %p121 = por %p119, %p120
      %p122 = scmp.ne.s32.totalorder %s113, %s114
      %p123 = scmp.eq.s32.totalorder %s19, 0
      %p124 = por %p122, %p123
      %p125 = scmp.ne.s32.totalorder %s113, %s114
      %p126 = scmp.eq.s32.totalorder %s20, 1
      %p127 = por %p125, %p126
      %p129 = scmp.ne.s32.totalorder %s114, %s128
      %p130 = scmp.eq.s32.totalorder %s20, 0
      %p131 = por %p129, %p130
      %s132 = ssub.s32 %s14, %s21
      %p133 = scmp.eq.s32.totalorder %s132, 0
      %s135 = sadd.s32 %s134, 1
      %s136 = scalar_select %p133, %s134, %s135
      %p139 = pneg %p133
      %p140 = scmp.eq.s32.totalorder %s14, 1
      %p141 = por %p139, %p140
      %p142 = scmp.ne.s32.totalorder %s134, %s137
      %p143 = scmp.eq.s32.totalorder %s14, 0
      %p144 = por %p142, %p143
      %p145 = scmp.ne.s32.totalorder %s134, %s137
      %p146 = scmp.eq.s32.totalorder %s19, 1
      %p147 = por %p145, %p146
      %p148 = scmp.ne.s32.totalorder %s137, %s138
      %p149 = scmp.eq.s32.totalorder %s19, 0
      %p150 = por %p148, %p149
      %p151 = scmp.ne.s32.totalorder %s137, %s138
      %p152 = scmp.eq.s32.totalorder %s20, 1
      %p153 = por %p151, %p152
      %p155 = scmp.ne.s32.totalorder %s138, %s154
      %p156 = scmp.eq.s32.totalorder %s20, 0
      %p157 = por %p155, %p156
      %p158 = scmp.le.s32.totalorder 1, %s14
      %p159 = scmp.lt.s32.totalorder %s14, 3
      %p160 = pnand %p158, %p159
      %p161 = pneg %p160
      // Predicated region
      $region9: #{no_graph_mixer.1} parent=5 // pred_check
        _
      $region10: #{no_graph_mixer.1} parent=5 // pred_check_branch
        %163 = sbr.rel (%p160) target = $region12
      $region11: #{no_graph_mixer.1} parent=5 // pred_region
        %s164 = ssub.s32 %s14, 1
        // Predicated region
        $region13: #{no_graph_mixer.1} parent=11 // pred_check
          %p165 = pneg %p61
        $region14: #{no_graph_mixer.1} parent=11 // pred_check_branch
          %167 = sbr.rel (%p165) target = $region16
        $region15: #{no_graph_mixer.1} parent=11 // pred_region
          _
        $region16: #{no_graph_mixer.1} parent=11 // pred_fallthru
          _
        // Predicated region
        $region17: #{no_graph_mixer.1} parent=11 // pred_check
          %p168 = pneg %p82
        $region18: #{no_graph_mixer.1} parent=11 // pred_check_branch
          %170 = sbr.rel (%p168) target = $region20
        $region19: #{no_graph_mixer.1} parent=11 // pred_region
          _
        $region20: #{no_graph_mixer.1} parent=11 // pred_fallthru
          _
        // Predicated region
        $region21: #{no_graph_mixer.1} parent=11 // pred_check
          %p171 = pneg %p103
        $region22: #{no_graph_mixer.1} parent=11 // pred_check_branch
          %173 = sbr.rel (%p171) target = $region24
        $region23: #{no_graph_mixer.1} parent=11 // pred_region
          _
        $region24: #{no_graph_mixer.1} parent=11 // pred_fallthru
          _
        // Predicated region
        $region25: #{no_graph_mixer.1} parent=11 // pred_check
          %p174 = pneg %p124
        $region26: #{no_graph_mixer.1} parent=11 // pred_check_branch
          %176 = sbr.rel (%p174) target = $region28
        $region27: #{no_graph_mixer.1} parent=11 // pred_region
          _
        $region28: #{no_graph_mixer.1} parent=11 // pred_fallthru
          _
      $region12: #{no_graph_mixer.1} parent=5 // pred_fallthru
        _
      %p177 = scmp.lt.s32.totalorder %s14, 2
      // Predicated region
      $region29: #{no_graph_mixer.1} parent=5 // pred_check
        %p178 = pneg %p177
      $region30: #{no_graph_mixer.1} parent=5 // pred_check_branch
        %180 = sbr.rel (%p178) target = $region32
      $region31: #{no_graph_mixer.1} parent=5 // pred_region
        // Predicated region
        $region33: #{no_graph_mixer.1} parent=31 // pred_check
          %p181 = pneg %p34
        $region34: #{no_graph_mixer.1} parent=31 // pred_check_branch
          %183 = sbr.rel (%p181) target = $region36
        $region35: #{no_graph_mixer.1} parent=31 // pred_region
          %s184 = sand.u32 %s24, 1
          %s185 = sand.u32 %s24, 1
          %s186 = smul.addr %s185, 64
          %s187 = scalar_lea.vmem [#allocation2], %s186
          %s188 = smul.u32 4, %s14
          %s189 = smul.addr %s188, 8
          %s190 = scalar_lea.vmem %s0, %s189
          // Predicated region
          $region37: #{no_graph_mixer.1} parent=35 // pred_check
            _
          $region38: #{no_graph_mixer.1} parent=35 // pred_check_branch
            %192 = sbr.rel (0) target = $region40
          $region39: #{no_graph_mixer.1} parent=35 // pred_region
            // Predicated region
            $region41: #{no_graph_mixer.1} parent=39 // pred_check
              _
            $region42: #{no_graph_mixer.1} parent=39 // pred_check_branch
              %194 = sbr.rel (0) target = $region44
            $region43: #{no_graph_mixer.1} parent=39 // pred_region
              loop: start=0, step=1, limit=1
              $region45: #{no_graph_mixer.1} parent=43 // loop_pre_header
                _
              $region46: #{no_graph_mixer.1} parent=43 // loop_header
                %s196 = sphi 0, %s200
                %p197 = scmp.ge.s32.totalorder %s196, 1
                %s201 = sphi %s190, %s190
                %s202 = sphi %s187, %s187
              $region47: #{no_graph_mixer.1} parent=43 // loop_header_branch
                %199 = sbr.rel (%p197) target = $region51
              $region48: #{no_graph_mixer.1} parent=43 // loop_body
                %v203 = vld [vmem:[%s201] sm:$0xff]
                %204 = vst [vmem:[%s202] sm:$0xff] %v203
                %v205 = vld [vmem:[%s201 + $0x8] sm:$0xff]
                %206 = vst [vmem:[%s202 + $0x8] sm:$0xff] %v205
                %v207 = vld [vmem:[%s201 + $0x10] sm:$0xff]
                %208 = vst [vmem:[%s202 + $0x10] sm:$0xff] %v207
                %v209 = vld [vmem:[%s201 + $0x18] sm:$0xff]
                %210 = vst [vmem:[%s202 + $0x18] sm:$0xff] %v209
                %v211 = vld [vmem:[%s201 + $0x40] sm:$0xff]
                %212 = vst [vmem:[%s202 + $0x20] sm:$0xff] %v211
                %v213 = vld [vmem:[%s201 + $0x48] sm:$0xff]
                %214 = vst [vmem:[%s202 + $0x28] sm:$0xff] %v213
                %v215 = vld [vmem:[%s201 + $0x50] sm:$0xff]
                %216 = vst [vmem:[%s202 + $0x30] sm:$0xff] %v215
                %v217 = vld [vmem:[%s201 + $0x58] sm:$0xff]
                %218 = vst [vmem:[%s202 + $0x38] sm:$0xff] %v217
              $region49: #{no_graph_mixer.1} parent=43 // loop_footer
                %s200 = sadd.s32 1, %s196
              $region50: #{no_graph_mixer.1} parent=43 // loop_footer_branch
                %195 = sbr.rel target = $region46
              $region51: #{no_graph_mixer.1} parent=43 // loop_exit
                _
            $region44: #{no_graph_mixer.1} parent=39 // pred_fallthru
              _
            // Predicated region
            $region52: #{no_graph_mixer.1} parent=39 // pred_check
              _
            $region53: #{no_graph_mixer.1} parent=39 // pred_check_branch
              %220 = sbr.rel target = $region55
            $region54: #{no_graph_mixer.1} parent=39 // pred_region
              _
            $region55: #{no_graph_mixer.1} parent=39 // pred_fallthru
              _
          $region40: #{no_graph_mixer.1} parent=35 // pred_fallthru
            _
          %221 = vnop
        $region36: #{no_graph_mixer.1} parent=31 // pred_fallthru
          _
      $region32: #{no_graph_mixer.1} parent=5 // pred_fallthru
        _
      %p222 = scmp.le.s32.totalorder 1, %s14
      %p223 = scmp.lt.s32.totalorder %s14, 3
      %p224 = pnand %p222, %p223
      %p225 = pneg %p224
      // Predicated region
      $region56: #{no_graph_mixer.1} parent=5 // pred_check
        _
      $region57: #{no_graph_mixer.1} parent=5 // pred_check_branch
        %227 = sbr.rel (%p224) target = $region59
      $region58: #{no_graph_mixer.1} parent=5 // pred_region
        %s228 = ssub.s32 %s14, 1
        %s229 = sand.u32 %s27, 1
        %s230 = sand.u32 %s27, 1
        %s231 = smul.addr %s230, 64
        %s232 = scalar_lea.vmem [#allocation2], %s231
        // Predicated region
        $region60: #{no_graph_mixer.1} parent=58 // pred_check
          %p233 = pneg %p40
        $region61: #{no_graph_mixer.1} parent=58 // pred_check_branch
          %235 = sbr.rel (%p233) target = $region63
        $region62: #{no_graph_mixer.1} parent=58 // pred_region
          _
        $region63: #{no_graph_mixer.1} parent=58 // pred_fallthru
          _
        %s236 = sand.u32 %s27, 1
        %s237 = sand.u32 %s27, 1
        %s238 = smul.addr %s237, 64
        %s239 = scalar_lea.vmem [#allocation2], %s238
        %p240 = pneg %p40
        %p241 = pneg %p37
        %p242 = pneg %p61
        %p243 = pneg %p58
        %p244 = pneg %p82
        %p245 = pneg %p79
        %p246 = pneg %p103
        %p247 = pneg %p100
        %p248 = pneg %p124
        %p249 = pneg %p121
        %p250 = pneg %p150
        %p251 = pneg %p147
        %s252 = sand.u32 %s137, 1
        %s253 = scalar_lea.sflag [#allocation4], %s252
        %s254 = sand.u32 %s137, 1
        %s255 = smul.addr %s254, 64
        %s256 = scalar_lea.vmem [#allocation3], %s255
        %s257 = smul.u32 4, %s19
        %s258 = smul.u32 4, %s19
        %v259 = vld [vmem:[%s232] sm:$0xff]
        %v260 = vld [vmem:[%s232 + $0x8] sm:$0xff]
        %v261 = vld [vmem:[%s232 + $0x10] sm:$0xff]
        %v262 = vld [vmem:[%s232 + $0x18] sm:$0xff]
        %v263 = vld [vmem:[%s232 + $0x20] sm:$0xff]
        %v264 = vld [vmem:[%s232 + $0x28] sm:$0xff]
        %v265 = vld [vmem:[%s232 + $0x30] sm:$0xff]
        %v266 = vld [vmem:[%s232 + $0x38] sm:$0xff]
        %v267 = vadd.f32 %v259, %v263
        %v268 = vrot.slane %v267, 4
        %v269 = vadd.f32 %v267, %v268
        %v270 = vrot.slane %v269, 2
        %v271 = vadd.f32 %v269, %v270
        %v272 = vrot.slane %v271, 1
        %v273 = vadd.f32 %v271, %v272
        %v274 = vadd.f32 %v260, %v264
        %v275 = vrot.slane %v274, 4
        %v276 = vadd.f32 %v274, %v275
        %v277 = vrot.slane %v276, 2
        %v278 = vadd.f32 %v276, %v277
        %v279 = vrot.slane %v278, 1
        %v280 = vadd.f32 %v278, %v279
        %v281 = vadd.f32 %v261, %v265
        %v282 = vrot.slane %v281, 4
        %v283 = vadd.f32 %v281, %v282
        %v284 = vrot.slane %v283, 2
        %v285 = vadd.f32 %v283, %v284
        %v286 = vrot.slane %v285, 1
        %v287 = vadd.f32 %v285, %v286
        %v288 = vadd.f32 %v262, %v266
        %v289 = vrot.slane %v288, 4
        %v290 = vadd.f32 %v288, %v289
        %v291 = vrot.slane %v290, 2
        %v292 = vadd.f32 %v290, %v291
        %v293 = vrot.slane %v292, 1
        %v294 = vadd.f32 %v292, %v293
        %v295 = vmul.f32 %v273, 0.0625
        %v296 = vmul.f32 %v280, 0.0625
        %v297 = vmul.f32 %v287, 0.0625
        %v298 = vmul.f32 %v294, 0.0625
        %v299 = vmul.f32 %v259, %v259
        %v300 = vmul.f32 %v260, %v260
        %v301 = vmul.f32 %v261, %v261
        %v302 = vmul.f32 %v262, %v262
        %v303 = vmul.f32 %v263, %v263
        %v304 = vmul.f32 %v264, %v264
        %v305 = vmul.f32 %v265, %v265
        %v306 = vmul.f32 %v266, %v266
        %v307 = vadd.f32 %v299, %v303
        %v308 = vrot.slane %v307, 4
        %v309 = vadd.f32 %v307, %v308
        %v310 = vrot.slane %v309, 2
        %v311 = vadd.f32 %v309, %v310
        %v312 = vrot.slane %v311, 1
        %v313 = vadd.f32 %v311, %v312
        %v314 = vadd.f32 %v300, %v304
        %v315 = vrot.slane %v314, 4
        %v316 = vadd.f32 %v314, %v315
        %v317 = vrot.slane %v316, 2
        %v318 = vadd.f32 %v316, %v317
        %v319 = vrot.slane %v318, 1
        %v320 = vadd.f32 %v318, %v319
        %v321 = vadd.f32 %v301, %v305
        %v322 = vrot.slane %v321, 4
        %v323 = vadd.f32 %v321, %v322
        %v324 = vrot.slane %v323, 2
        %v325 = vadd.f32 %v323, %v324
        %v326 = vrot.slane %v325, 1
        %v327 = vadd.f32 %v325, %v326
        %v328 = vadd.f32 %v302, %v306
        %v329 = vrot.slane %v328, 4
        %v330 = vadd.f32 %v328, %v329
        %v331 = vrot.slane %v330, 2
        %v332 = vadd.f32 %v330, %v331
        %v333 = vrot.slane %v332, 1
        %v334 = vadd.f32 %v332, %v333
        %v335 = vmul.f32 %v313, 0.0625
        %v336 = vmul.f32 %v320, 0.0625
        %v337 = vmul.f32 %v327, 0.0625
        %v338 = vmul.f32 %v334, 0.0625
        %v339 = vmul.f32 %v295, %v295
        %v340 = vmul.f32 %v296, %v296
        %v341 = vmul.f32 %v297, %v297
        %v342 = vmul.f32 %v298, %v298
        %v343 = vsub.f32 %v335, %v339
        %v344 = vsub.f32 %v336, %v340
        %v345 = vsub.f32 %v337, %v341
        %v346 = vsub.f32 %v338, %v342
        %v347 = vsub.f32 %v259, %v295
        %v348 = vsub.f32 %v260, %v296
        %v349 = vsub.f32 %v261, %v297
        %v350 = vsub.f32 %v262, %v298
        %v351 = vsub.f32 %v263, %v295
        %v352 = vsub.f32 %v264, %v296
        %v353 = vsub.f32 %v265, %v297
        %v354 = vsub.f32 %v266, %v298
        %v355 = vadd.f32 %v343, 1e-05
        %v356 = vadd.f32 %v344, 1e-05
        %v357 = vadd.f32 %v345, 1e-05
        %v358 = vadd.f32 %v346, 1e-05
        %v359 = vrsqrt.pop %v355
        %v360 = vrsqrt.pop %v356
        %v361 = vrsqrt.pop %v357
        %v362 = vrsqrt.pop %v358
        %v363 = vmul.f32 %v347, %v359
        %v364 = vmul.f32 %v348, %v360
        %v365 = vmul.f32 %v349, %v361
        %v366 = vmul.f32 %v350, %v362
        %v367 = vmul.f32 %v351, %v359
        %v368 = vmul.f32 %v352, %v360
        %v369 = vmul.f32 %v353, %v361
        %v370 = vmul.f32 %v354, %v362
        %v371 = vld [vmem:[%s1] sm:$0xff]
        %v372 = vld [vmem:[%s1 + $0x8] sm:$0xff]
        %v373 = vld [vmem:[%s1 + $0x10] sm:$0xf]
        %v374 = vld [vmem:[%s2] sm:$0xff]
        %v375 = vld [vmem:[%s2 + $0x8] sm:$0xff]
        %v376 = vld [vmem:[%s2 + $0x10] sm:$0xf]
        %378 = vset.pattern.permute.xlu0 0
        %379 = vperm.xlu0 %378, %v374
        %v380 = vpop.permute.xlu0 %379
        %383 = vset.pattern.permute.xlu0 0
        %384 = vperm.xlu0 %383, %v375
        %v385 = vpop.permute.xlu0 %384
        %388 = vset.pattern.permute.xlu0 0
        %389 = vperm.xlu0 %388, %v376
        %v390 = vpop.permute.xlu0 %389
        %vm392 = vcmask 130048
        %v394 = vsel %vm392, %v371, 0
        %v397 = vsel %vm392, %v372, 0
        %v400 = vsel %vm392, %v373, 0
        %402 = vmatprep.subr.mxu0 %v364
        %403 = vmatpush1.msra.mxu0 %v363
        %404 = vmatprep.subr.mxu0 %v368
        %405 = vmatpush1.msra.mxu0 %v367
        %406 = vmatprep.subr.mxu0 0.0
        %407 = vmatpush1.msra.mxu0 0.0
        %408 = vmatprep.subr.mxu0 0.0
        %409 = vmatpush1.msra.mxu0 0.0
        %410 = vmatprep.subr.mxu0 0.0
        %411 = vmatpush1.msra.mxu0 0.0
        %412 = vmatprep.subr.mxu0 0.0
        %413 = vmatpush1.msra.mxu0 0.0
        %414 = vmatprep.subr.mxu0 0.0
        %415 = vmatpush1.msra.mxu0 0.0
        %416 = vmatprep.subr.mxu0 0.0
        %417 = vmatpush1.msra.mxu0 0.0
        %418 = vmatprep.subr.mxu0 0.0
        %419 = vmatpush1.msra.mxu0 0.0
        %420 = vmatprep.subr.mxu0 0.0
        %421 = vmatpush1.msra.mxu0 0.0
        %422 = vmatprep.subr.mxu0 0.0
        %423 = vmatpush1.msra.mxu0 0.0
        %424 = vmatprep.subr.mxu0 0.0
        %425 = vmatpush1.msra.mxu0 0.0
        %426 = vmatprep.subr.mxu0 0.0
        %427 = vmatpush1.msra.mxu0 0.0
        %428 = vmatprep.subr.mxu0 0.0
        %429 = vmatpush1.msra.mxu0 0.0
        %430 = vmatprep.subr.mxu0 0.0
        %431 = vmatpush1.msra.mxu0 0.0
        %432 = vmatprep.subr.mxu0 0.0
        %433 = vmatpush1.msra.mxu0 0.0
        %434 = vmatprep.subr.mxu0 0.0
        %435 = vmatpush1.msra.mxu0 0.0
        %436 = vmatprep.subr.mxu0 0.0
        %437 = vmatpush1.msra.mxu0 0.0
        %438 = vmatprep.subr.mxu0 0.0
        %439 = vmatpush1.msra.mxu0 0.0
        %440 = vmatprep.subr.mxu0 0.0
        %441 = vmatpush1.msra.mxu0 0.0
        %442 = vmatprep.subr.mxu0 0.0
        %443 = vmatpush1.msra.mxu0 0.0
        %444 = vmatprep.subr.mxu0 0.0
        %445 = vmatpush1.msra.mxu0 0.0
        %446 = vmatprep.subr.mxu0 0.0
        %447 = vmatpush1.msra.mxu0 0.0
        %448 = vmatprep.subr.mxu0 0.0
        %449 = vmatpush1.msra.mxu0 0.0
        %450 = vmatprep.subr.mxu0 0.0
        %451 = vmatpush1.msra.mxu0 0.0
        %452 = vmatprep.subr.mxu0 0.0
        %453 = vmatpush1.msra.mxu0 0.0
        %454 = vmatprep.subr.mxu0 0.0
        %455 = vmatpush1.msra.mxu0 0.0
        %456 = vmatprep.subr.mxu0 0.0
        %457 = vmatpush1.msra.mxu0 0.0
        %458 = vmatprep.subr.mxu0 0.0
        %459 = vmatpush1.msra.mxu0 0.0
        %460 = vmatprep.subr.mxu0 0.0
        %461 = vmatpush1.msra.mxu0 0.0
        %462 = vmatprep.subr.mxu0 0.0
        %463 = vmatpush1.msra.mxu0 0.0
        %464 = vmatprep.subr.mxu0 0.0
        %465 = vmatpush1.msra.mxu0 0.0
        %466 = vmatprep.mubr.f32.mxu0 0.0
        %467 = vmatmul.mubr.f32.gmra.mrb[0].mxu0 %v394
        %v468 = vpop.f32.mrb[0].mxu0
        %v469 = vadd.f32 %v380, %v468
        %v470 = vpop.f32.mrb[0].mxu0
        %v471 = vadd.f32 %v380, %v470
        %472 = vmatprep.mubr.f32.mxu0 0.0
        %473 = vmatmul.mubr.f32.gmra.mrb[0].mxu0 %v397
        %v474 = vpop.f32.mrb[0].mxu0
        %v475 = vadd.f32 %v385, %v474
        %v476 = vpop.f32.mrb[0].mxu0
        %v477 = vadd.f32 %v385, %v476
        %478 = vmatprep.mubr.f32.mxu0 0.0
        %479 = vmatmul.mubr.f32.gmra.mrb[0].mxu0 %v400
        %v480 = vpop.f32.mrb[0].mxu0
        %v481 = vadd.f32 %v390, %v480
        %v482 = vpop.f32.mrb[0].mxu0
        %v483 = vadd.f32 %v390, %v482
        %484 = vdwg.mxu0
        %485 = vmatprep.subr.mxu0 %v366
        %486 = vmatpush1.msra.mxu0 %v365
        %487 = vmatprep.subr.mxu0 %v370
        %488 = vmatpush1.msra.mxu0 %v369
        %489 = vmatprep.subr.mxu0 0.0
        %490 = vmatpush1.msra.mxu0 0.0
        %491 = vmatprep.subr.mxu0 0.0
        %492 = vmatpush1.msra.mxu0 0.0
        %493 = vmatprep.subr.mxu0 0.0
        %494 = vmatpush1.msra.mxu0 0.0
        %495 = vmatprep.subr.mxu0 0.0
        %496 = vmatpush1.msra.mxu0 0.0
        %497 = vmatprep.subr.mxu0 0.0
        %498 = vmatpush1.msra.mxu0 0.0
        %499 = vmatprep.subr.mxu0 0.0
        %500 = vmatpush1.msra.mxu0 0.0
        %501 = vmatprep.subr.mxu0 0.0
        %502 = vmatpush1.msra.mxu0 0.0
        %503 = vmatprep.subr.mxu0 0.0
        %504 = vmatpush1.msra.mxu0 0.0
        %505 = vmatprep.subr.mxu0 0.0
        %506 = vmatpush1.msra.mxu0 0.0
        %507 = vmatprep.subr.mxu0 0.0
        %508 = vmatpush1.msra.mxu0 0.0
        %509 = vmatprep.subr.mxu0 0.0
        %510 = vmatpush1.msra.mxu0 0.0
        %511 = vmatprep.subr.mxu0 0.0
        %512 = vmatpush1.msra.mxu0 0.0
        %513 = vmatprep.subr.mxu0 0.0
        %514 = vmatpush1.msra.mxu0 0.0
        %515 = vmatprep.subr.mxu0 0.0
        %516 = vmatpush1.msra.mxu0 0.0
        %517 = vmatprep.subr.mxu0 0.0
        %518 = vmatpush1.msra.mxu0 0.0
        %519 = vmatprep.subr.mxu0 0.0
        %520 = vmatpush1.msra.mxu0 0.0
        %521 = vmatprep.subr.mxu0 0.0
        %522 = vmatpush1.msra.mxu0 0.0
        %523 = vmatprep.subr.mxu0 0.0
        %524 = vmatpush1.msra.mxu0 0.0
        %525 = vmatprep.subr.mxu0 0.0
        %526 = vmatpush1.msra.mxu0 0.0
        %527 = vmatprep.subr.mxu0 0.0
        %528 = vmatpush1.msra.mxu0 0.0
        %529 = vmatprep.subr.mxu0 0.0
        %530 = vmatpush1.msra.mxu0 0.0
        %531 = vmatprep.subr.mxu0 0.0
        %532 = vmatpush1.msra.mxu0 0.0
        %533 = vmatprep.subr.mxu0 0.0
        %534 = vmatpush1.msra.mxu0 0.0
        %535 = vmatprep.subr.mxu0 0.0
        %536 = vmatpush1.msra.mxu0 0.0
        %537 = vmatprep.subr.mxu0 0.0
        %538 = vmatpush1.msra.mxu0 0.0
        %539 = vmatprep.subr.mxu0 0.0
        %540 = vmatpush1.msra.mxu0 0.0
        %541 = vmatprep.subr.mxu0 0.0
        %542 = vmatpush1.msra.mxu0 0.0
        %543 = vmatprep.subr.mxu0 0.0
        %544 = vmatpush1.msra.mxu0 0.0
        %545 = vmatprep.subr.mxu0 0.0
        %546 = vmatpush1.msra.mxu0 0.0
        %547 = vmatprep.subr.mxu0 0.0
        %548 = vmatpush1.msra.mxu0 0.0
        %549 = vmatprep.mubr.f32.mxu0 0.0
        %550 = vmatmul.mubr.f32.gmra.mrb[0].mxu0 %v394
        %v551 = vpop.f32.mrb[0].mxu0
        %v552 = vadd.f32 %v380, %v551
        %v553 = vpop.f32.mrb[0].mxu0
        %v554 = vadd.f32 %v380, %v553
        %555 = vmatprep.mubr.f32.mxu0 0.0
        %556 = vmatmul.mubr.f32.gmra.mrb[0].mxu0 %v397
        %v557 = vpop.f32.mrb[0].mxu0
        %v558 = vadd.f32 %v385, %v557
        %v559 = vpop.f32.mrb[0].mxu0
        %v560 = vadd.f32 %v385, %v559
        %561 = vmatprep.mubr.f32.mxu0 0.0
        %562 = vmatmul.mubr.f32.gmra.mrb[0].mxu0 %v400
        %v563 = vpop.f32.mrb[0].mxu0
        %v564 = vadd.f32 %v390, %v563
        %v565 = vpop.f32.mrb[0].mxu0
        %v566 = vadd.f32 %v390, %v565
        %567 = vdwg.mxu0
        %v568 = vadd.f32 %v469, 3.0
        %v569 = vadd.f32 %v471, 3.0
        %v570 = vadd.f32 %v552, 3.0
        %v571 = vadd.f32 %v554, 3.0
        %v572 = vadd.f32 %v475, 3.0
        %v573 = vadd.f32 %v477, 3.0
        %v574 = vadd.f32 %v558, 3.0
        %v575 = vadd.f32 %v560, 3.0
        %v576 = vadd.f32 %v481, 3.0
        %v577 = vadd.f32 %v483, 3.0
        %v578 = vadd.f32 %v564, 3.0
        %v579 = vadd.f32 %v566, 3.0
        %v580 = vmax.f32 %v568, 0.0
        %v581 = vmax.f32 %v569, 0.0
        %v582 = vmax.f32 %v570, 0.0
        %v583 = vmax.f32 %v571, 0.0
        %v584 = vmax.f32 %v572, 0.0
        %v585 = vmax.f32 %v573, 0.0
        %v586 = vmax.f32 %v574, 0.0
        %v587 = vmax.f32 %v575, 0.0
        %v588 = vmax.f32 %v576, 0.0
        %v589 = vmax.f32 %v577, 0.0
        %v590 = vmax.f32 %v578, 0.0
        %v591 = vmax.f32 %v579, 0.0
        %v592 = vmin.f32 %v580, 6.0
        %v593 = vmin.f32 %v581, 6.0
        %v594 = vmin.f32 %v582, 6.0
        %v595 = vmin.f32 %v583, 6.0
        %v596 = vmin.f32 %v584, 6.0
        %v597 = vmin.f32 %v585, 6.0
        %v598 = vmin.f32 %v586, 6.0
        %v599 = vmin.f32 %v587, 6.0
        %v600 = vmin.f32 %v588, 6.0
        %v601 = vmin.f32 %v589, 6.0
        %v602 = vmin.f32 %v590, 6.0
        %v603 = vmin.f32 %v591, 6.0
        %v604 = vmul.f32 %v469, %v592
        %v605 = vmul.f32 %v471, %v593
        %v606 = vmul.f32 %v552, %v594
        %v607 = vmul.f32 %v554, %v595
        %v608 = vmul.f32 %v475, %v596
        %v609 = vmul.f32 %v477, %v597
        %v610 = vmul.f32 %v558, %v598
        %v611 = vmul.f32 %v560, %v599
        %v612 = vmul.f32 %v481, %v600
        %v613 = vmul.f32 %v483, %v601
        %v614 = vmul.f32 %v564, %v602
        %v615 = vmul.f32 %v566, %v603
        %v616 = vld [vmem:[%s3] sm:$0xff]
        %v617 = vld [vmem:[%s3 + $0x8] sm:$0xff]
        %v618 = vld [vmem:[%s4] sm:$0xff]
        %v619 = vld [vmem:[%s4 + $0x8] sm:$0xff]
        %621 = vset.pattern.permute.xlu0 0
        %622 = vperm.xlu0 %621, %v618
        %v623 = vpop.permute.xlu0 %622
        %626 = vset.pattern.permute.xlu0 0
        %627 = vperm.xlu0 %626, %v619
        %v628 = vpop.permute.xlu0 %627
        %vm630 = vcmask 162816
        %v632 = vsel %vm630, %v616, 0
        %v635 = vsel %vm630, %v617, 0
        %vm637 = vcmask 1043456
        %v639 = vsel %vm637, %v612, 0
        %v642 = vsel %vm637, %v613, 0
        %v645 = vsel %vm637, %v614, 0
        %v648 = vsel %vm637, %v615, 0
        %650 = vmatprep.subr.mxu0 %v605
        %651 = vmatpush1.msra.mxu0 %v604
        %652 = vmatprep.subr.mxu0 %v609
        %653 = vmatpush1.msra.mxu0 %v608
        %654 = vmatprep.subr.mxu0 %v642
        %655 = vmatpush1.msra.mxu0 %v639
        %656 = vmatprep.subr.mxu0 0.0
        %657 = vmatpush1.msra.mxu0 0.0
        %658 = vmatprep.subr.mxu0 0.0
        %659 = vmatpush1.msra.mxu0 0.0
        %660 = vmatprep.subr.mxu0 0.0
        %661 = vmatpush1.msra.mxu0 0.0
        %662 = vmatprep.subr.mxu0 0.0
        %663 = vmatpush1.msra.mxu0 0.0
        %664 = vmatprep.subr.mxu0 0.0
        %665 = vmatpush1.msra.mxu0 0.0
        %666 = vmatprep.subr.mxu0 0.0
        %667 = vmatpush1.msra.mxu0 0.0
        %668 = vmatprep.subr.mxu0 0.0
        %669 = vmatpush1.msra.mxu0 0.0
        %670 = vmatprep.subr.mxu0 0.0
        %671 = vmatpush1.msra.mxu0 0.0
        %672 = vmatprep.subr.mxu0 0.0
        %673 = vmatpush1.msra.mxu0 0.0
        %674 = vmatprep.subr.mxu0 0.0
        %675 = vmatpush1.msra.mxu0 0.0
        %676 = vmatprep.subr.mxu0 0.0
        %677 = vmatpush1.msra.mxu0 0.0
        %678 = vmatprep.subr.mxu0 0.0
        %679 = vmatpush1.msra.mxu0 0.0
        %680 = vmatprep.subr.mxu0 0.0
        %681 = vmatpush1.msra.mxu0 0.0
        %682 = vmatprep.subr.mxu0 0.0
        %683 = vmatpush1.msra.mxu0 0.0
        %684 = vmatprep.subr.mxu0 0.0
        %685 = vmatpush1.msra.mxu0 0.0
        %686 = vmatprep.subr.mxu0 0.0
        %687 = vmatpush1.msra.mxu0 0.0
        %688 = vmatprep.subr.mxu0 0.0
        %689 = vmatpush1.msra.mxu0 0.0
        %690 = vmatprep.subr.mxu0 0.0
        %691 = vmatpush1.msra.mxu0 0.0
        %692 = vmatprep.subr.mxu0 0.0
        %693 = vmatpush1.msra.mxu0 0.0
        %694 = vmatprep.subr.mxu0 0.0
        %695 = vmatpush1.msra.mxu0 0.0
        %696 = vmatprep.subr.mxu0 0.0
        %697 = vmatpush1.msra.mxu0 0.0
        %698 = vmatprep.subr.mxu0 0.0
        %699 = vmatpush1.msra.mxu0 0.0
        %700 = vmatprep.subr.mxu0 0.0
        %701 = vmatpush1.msra.mxu0 0.0
        %702 = vmatprep.subr.mxu0 0.0
        %703 = vmatpush1.msra.mxu0 0.0
        %704 = vmatprep.subr.mxu0 0.0
        %705 = vmatpush1.msra.mxu0 0.0
        %706 = vmatprep.subr.mxu0 0.0
        %707 = vmatpush1.msra.mxu0 0.0
        %708 = vmatprep.subr.mxu0 0.0
        %709 = vmatpush1.msra.mxu0 0.0
        %710 = vmatprep.subr.mxu0 0.0
        %711 = vmatpush1.msra.mxu0 0.0
        %712 = vmatprep.subr.mxu0 0.0
        %713 = vmatpush1.msra.mxu0 0.0
        %714 = vmatprep.mubr.f32.mxu0 0.0
        %715 = vmatmul.mubr.f32.gmra.mrb[0].mxu0 %v632
        %v716 = vpop.f32.mrb[0].mxu0
        %v717 = vadd.f32 %v623, %v716
        %v718 = vpop.f32.mrb[0].mxu0
        %v719 = vadd.f32 %v623, %v718
        %720 = vmatprep.mubr.f32.mxu0 0.0
        %721 = vmatmul.mubr.f32.gmra.mrb[0].mxu0 %v635
        %v722 = vpop.f32.mrb[0].mxu0
        %v723 = vadd.f32 %v628, %v722
        %v724 = vpop.f32.mrb[0].mxu0
        %v725 = vadd.f32 %v628, %v724
        %726 = vdwg.mxu0
        %727 = vmatprep.subr.mxu0 %v607
        %728 = vmatpush1.msra.mxu0 %v606
        %729 = vmatprep.subr.mxu0 %v611
        %730 = vmatpush1.msra.mxu0 %v610
        %731 = vmatprep.subr.mxu0 %v648
        %732 = vmatpush1.msra.mxu0 %v645
        %733 = vmatprep.subr.mxu0 0.0
        %734 = vmatpush1.msra.mxu0 0.0
        %735 = vmatprep.subr.mxu0 0.0
        %736 = vmatpush1.msra.mxu0 0.0
        %737 = vmatprep.subr.mxu0 0.0
        %738 = vmatpush1.msra.mxu0 0.0
        %739 = vmatprep.subr.mxu0 0.0
        %740 = vmatpush1.msra.mxu0 0.0
        %741 = vmatprep.subr.mxu0 0.0
        %742 = vmatpush1.msra.mxu0 0.0
        %743 = vmatprep.subr.mxu0 0.0
        %744 = vmatpush1.msra.mxu0 0.0
        %745 = vmatprep.subr.mxu0 0.0
        %746 = vmatpush1.msra.mxu0 0.0
        %747 = vmatprep.subr.mxu0 0.0
        %748 = vmatpush1.msra.mxu0 0.0
        %749 = vmatprep.subr.mxu0 0.0
        %750 = vmatpush1.msra.mxu0 0.0
        %751 = vmatprep.subr.mxu0 0.0
        %752 = vmatpush1.msra.mxu0 0.0
        %753 = vmatprep.subr.mxu0 0.0
        %754 = vmatpush1.msra.mxu0 0.0
        %755 = vmatprep.subr.mxu0 0.0
        %756 = vmatpush1.msra.mxu0 0.0
        %757 = vmatprep.subr.mxu0 0.0
        %758 = vmatpush1.msra.mxu0 0.0
        %759 = vmatprep.subr.mxu0 0.0
        %760 = vmatpush1.msra.mxu0 0.0
        %761 = vmatprep.subr.mxu0 0.0
        %762 = vmatpush1.msra.mxu0 0.0
        %763 = vmatprep.subr.mxu0 0.0
        %764 = vmatpush1.msra.mxu0 0.0
        %765 = vmatprep.subr.mxu0 0.0
        %766 = vmatpush1.msra.mxu0 0.0
        %767 = vmatprep.subr.mxu0 0.0
        %768 = vmatpush1.msra.mxu0 0.0
        %769 = vmatprep.subr.mxu0 0.0
        %770 = vmatpush1.msra.mxu0 0.0
        %771 = vmatprep.subr.mxu0 0.0
        %772 = vmatpush1.msra.mxu0 0.0
        %773 = vmatprep.subr.mxu0 0.0
        %774 = vmatpush1.msra.mxu0 0.0
        %775 = vmatprep.subr.mxu0 0.0
        %776 = vmatpush1.msra.mxu0 0.0
        %777 = vmatprep.subr.mxu0 0.0
        %778 = vmatpush1.msra.mxu0 0.0
        %779 = vmatprep.subr.mxu0 0.0
        %780 = vmatpush1.msra.mxu0 0.0
        %781 = vmatprep.subr.mxu0 0.0
        %782 = vmatpush1.msra.mxu0 0.0
        %783 = vmatprep.subr.mxu0 0.0
        %784 = vmatpush1.msra.mxu0 0.0
        %785 = vmatprep.subr.mxu0 0.0
        %786 = vmatpush1.msra.mxu0 0.0
        %787 = vmatprep.subr.mxu0 0.0
        %788 = vmatpush1.msra.mxu0 0.0
        %789 = vmatprep.subr.mxu0 0.0
        %790 = vmatpush1.msra.mxu0 0.0
        %791 = vmatprep.mubr.f32.mxu0 0.0
        %792 = vmatmul.mubr.f32.gmra.mrb[0].mxu0 %v632
        %v793 = vpop.f32.mrb[0].mxu0
        %v794 = vadd.f32 %v623, %v793
        %v795 = vpop.f32.mrb[0].mxu0
        %v796 = vadd.f32 %v623, %v795
        %797 = vmatprep.mubr.f32.mxu0 0.0
        %798 = vmatmul.mubr.f32.gmra.mrb[0].mxu0 %v635
        %v799 = vpop.f32.mrb[0].mxu0
        %v800 = vadd.f32 %v628, %v799
        %v801 = vpop.f32.mrb[0].mxu0
        %v802 = vadd.f32 %v628, %v801
        %803 = vdwg.mxu0
        %804 = vst [vmem:[%s256] sm:$0xff] %v717
        %805 = vst [vmem:[%s256 + $0x8] sm:$0xff] %v719
        %806 = vst [vmem:[%s256 + $0x10] sm:$0xff] %v794
        %807 = vst [vmem:[%s256 + $0x18] sm:$0xff] %v796
        %808 = vst [vmem:[%s256 + $0x20] sm:$0xff] %v723
        %809 = vst [vmem:[%s256 + $0x28] sm:$0xff] %v725
        %810 = vst [vmem:[%s256 + $0x30] sm:$0xff] %v800
        %811 = vst [vmem:[%s256 + $0x38] sm:$0xff] %v802
        %s812 = sand.u32 %s137, 1
        %s813 = scalar_lea.sflag [#allocation4], %s812
        %s814 = sand.u32 %s137, 1
        %s815 = smul.addr %s814, 64
        %s816 = scalar_lea.vmem [#allocation3], %s815
        // Predicated region
        $region64: #{no_graph_mixer.1} parent=58 // pred_check
          %p817 = pneg %p147
        $region65: #{no_graph_mixer.1} parent=58 // pred_check_branch
          %819 = sbr.rel (%p817) target = $region67
        $region66: #{no_graph_mixer.1} parent=58 // pred_region
          %s820 = smul.u32 4, %s19
          %s822 = ssub.s32 1024, 1024
          %823 = vsyncadd %s813, %s822
          %s824 = smul.addr %s820, 128
          %s825 = scalar_lea.hbm %s5, %s824
          %s826 = sshll.u32 %s816, 4
          %s827 = int_to_ptr.vmem [resolvable:$true] %s826
          %832 = dma.vmem_to_hbm [thread:$0]  %s827, 1024, %s825, %s813, 512, 1024, 32
        $region67: #{no_graph_mixer.1} parent=58 // pred_fallthru
          _
      $region59: #{no_graph_mixer.1} parent=5 // pred_fallthru
        _
      %p833 = scmp.le.s32.totalorder 2, %s14
      // Predicated region
      $region68: #{no_graph_mixer.1} parent=5 // pred_check
        %p834 = pneg %p833
      $region69: #{no_graph_mixer.1} parent=5 // pred_check_branch
        %836 = sbr.rel (%p834) target = $region71
      $region70: #{no_graph_mixer.1} parent=5 // pred_region
        %s837 = ssub.s32 %s14, 2
        // Predicated region
        $region72: #{no_graph_mixer.1} parent=70 // pred_check
          %p838 = pneg %p153
        $region73: #{no_graph_mixer.1} parent=70 // pred_check_branch
          %840 = sbr.rel (%p838) target = $region75
        $region74: #{no_graph_mixer.1} parent=70 // pred_region
          %s841 = sand.u32 %s138, 1
          %s842 = scalar_lea.sflag [#allocation4], %s841
          %s843 = sand.u32 %s138, 1
          %s844 = smul.addr %s843, 64
          %s845 = scalar_lea.vmem [#allocation3], %s844
          %846 = dma.done %s842, 1024
        $region75: #{no_graph_mixer.1} parent=70 // pred_fallthru
          _
      $region71: #{no_graph_mixer.1} parent=5 // pred_fallthru
        _
    $region6: #{no_graph_mixer.1} parent=1 // loop_footer
      %s18 = sadd.s32 1, %s14
    $region7: #{no_graph_mixer.1} parent=1 // loop_footer_branch
      %13 = sbr.rel target = $region3
    $region8: #{no_graph_mixer.1} parent=1 // loop_exit
      _
    %847 = vsyncpa [#allocation4], 1
    %s848 = scalar_lea.sflag [#allocation4], 1
    %849 = vsyncpa %s848, 1

</llo_original>
